<compile_context>
chip_gen: v5e
topology: v5e:2x2
jax: 0.10.0
libtpu: 0.0.40
codegen_flags: <defaults>
</compile_context>

<pallas_src>
import jax
import jax.numpy as jnp
from jax.experimental import pallas as pl
from jax.experimental.pallas import tpu as pltpu


D_PAD = 128  # lane width for the hidden (mid) dimension — MXU / vreg friendly


def _round_up(x, m):
    return ((x + m - 1) // m) * m


def _choose_tiling(B, tile_b):
    """Pick (TB, B_pad).

    * TB is a multiple of 16 (keeps bf16 sublane packing aligned; fine for f32),
      B_pad is a multiple of TB.
    * Tiny batches: a single tile equal to the full (8-row padded) array.
    * Otherwise at least 2 grid steps (v7x megacore) with TB near B / n_steps
      so the last tile does not throw away most of its work.
    """
    B_min = _round_up(B, 8)
    if B_min <= 128:
        return B_min, B_min
    tile_b = max(16, _round_up(tile_b, 16))
    n_steps = max(2, pl.cdiv(B_min, tile_b))
    TB = min(tile_b, _round_up(pl.cdiv(B_min, n_steps), 16))
    return TB, _round_up(B_min, TB)


def critic_q1_kernel(s_ref, a_ref, w1s_ref, w1a_ref, b1_ref,
                     w2_ref, b2_ref, w3_ref, b3_ref, w4_ref, b4_ref, o_ref):
    # net_sa layer 1: Linear(state_dim + action_dim -> mid) + ReLU.
    # cat(state, action) @ w1 == state @ w1[:sd] + action @ w1[sd:].
    h = (jnp.dot(s_ref[...], w1s_ref[...], preferred_element_type=jnp.float32)
         + jnp.dot(a_ref[...], w1a_ref[...], preferred_element_type=jnp.float32)
         + b1_ref[...])
    h = jnp.maximum(h, 0.0)

    # net_sa layer 2: Linear(mid -> mid) + ReLU.
    h = jnp.dot(h.astype(w2_ref.dtype), w2_ref[...],
                preferred_element_type=jnp.float32) + b2_ref[...]
    h = jnp.maximum(h, 0.0)

    # net_q1 layer 1: Linear(mid -> mid) + Hardswish  (z * relu6(z + 3) / 6).
    z = jnp.dot(h.astype(w3_ref.dtype), w3_ref[...],
                preferred_element_type=jnp.float32) + b3_ref[...]
    h = z * jnp.clip(z + 3.0, 0.0, 6.0) * (1.0 / 6.0)

    # net_q1 layer 2: Linear(mid -> 1).  Width-1 output -> VPU multiply +
    # cross-lane reduction (XLU) instead of a padded 128x128 MXU matmul.
    q = jnp.sum(h * w4_ref[...], axis=-1, keepdims=True) + b4_ref[...]
    o_ref[...] = q.astype(o_ref.dtype)


def critic_q1_forward(state, action, params, *, tile_b=2048,
                      matmul_dtype=jnp.float32):
    """state: [B, state_dim], action: [B, action_dim]  ->  q1: [B, 1] (f32)."""
    B, state_dim = state.shape
    action_dim = action.shape[1]
    in_dim = state_dim + action_dim
    mid_dim = params["w1"].shape[1]
    assert in_dim <= D_PAD and mid_dim <= D_PAD

    TB, B_pad = _choose_tiling(B, tile_b)
    grid = (B_pad // TB,)

    # Activations: cast matmul operands (bf16 halves HBM/VMEM on v6e/v7x);
    # only pad along the batch axis (cheap, often a no-op). No lane padding.
    s = state.astype(matmul_dtype)
    a = action.astype(matmul_dtype)
    if B_pad != B:
        s = jnp.pad(s, ((0, B_pad - B), (0, 0)))
        a = jnp.pad(a, ((0, B_pad - B), (0, 0)))

    def pad2d(w, rows, cols, dtype):
        r, c = w.shape
        return jnp.pad(w.astype(dtype), ((0, rows - r), (0, cols - c)))

    # Weight layout: [in, out], mid padded to 128 lanes.  Zero padding is
    # exact: padded inputs hit zero weight rows, padded outputs get zero bias,
    # and ReLU(0) = Hardswish(0) = 0.  (Tiny; in practice pre-pad once.)
    w1 = params["w1"]
    w1s = pad2d(w1[:state_dim], state_dim, D_PAD, matmul_dtype)
    w1a = pad2d(w1[state_dim:], action_dim, D_PAD, matmul_dtype)
    w2 = pad2d(params["w2"], D_PAD, D_PAD, matmul_dtype)
    w3 = pad2d(params["w3"], D_PAD, D_PAD, matmul_dtype)
    w4 = pad2d(params["w4"].T, 1, D_PAD, jnp.float32)   # VPU path stays f32
    b1 = pad2d(params["b1"], 1, D_PAD, jnp.float32)
    b2 = pad2d(params["b2"], 1, D_PAD, jnp.float32)
    b3 = pad2d(params["b3"], 1, D_PAD, jnp.float32)
    b4 = params["b4"].astype(jnp.float32)                # [1, 1]

    # Streaming tiles along the batch axis ...
    s_spec = pl.BlockSpec((TB, state_dim), lambda i: (i, 0))
    a_spec = pl.BlockSpec((TB, action_dim), lambda i: (i, 0))
    o_spec = pl.BlockSpec((TB, 1), lambda i: (i, 0))

    # ... and VMEM-resident parameters (constant index_map -> not re-fetched).
    def const(shape):
        return pl.BlockSpec(shape, lambda i: (0, 0))

    dsize = jnp.dtype(matmul_dtype).itemsize
    flops = 2 * B_pad * (in_dim * D_PAD + 2 * D_PAD * D_PAD + D_PAD)
    bytes_accessed = (B_pad * in_dim * dsize            # state + action reads
                      + B_pad * 4                       # q1 writeback (f32)
                      + (in_dim * D_PAD + 2 * D_PAD * D_PAD) * dsize  # mm weights
                      + 5 * D_PAD * 4 + 4)              # biases + w4 row (f32)
    cost = pl.CostEstimate(flops=flops, transcendentals=0,
                           bytes_accessed=bytes_accessed)

    out = pl.pallas_call(
        critic_q1_kernel,
        out_shape=jax.ShapeDtypeStruct((B_pad, 1), jnp.float32),
        grid=grid,
        in_specs=[s_spec, a_spec,
                  const((state_dim, D_PAD)), const((action_dim, D_PAD)),
                  const((1, D_PAD)),
                  const((D_PAD, D_PAD)), const((1, D_PAD)),
                  const((D_PAD, D_PAD)), const((1, D_PAD)),
                  const((1, D_PAD)), const((1, 1))],
        out_specs=o_spec,
        compiler_params=pltpu.CompilerParams(
            dimension_semantics=("parallel",)),
        cost_estimate=cost,
    )(s, a, w1s, w1a, b1, w2, b2, w3, b3, w4, b4)

    return out[:B]


def init_params(key, state_dim, mid_dim, action_dim):
    """nn.Linear-style init; weights stored as [in_dim, out_dim] (transposed)."""
    dims = [(state_dim + action_dim, mid_dim),  # net_sa[0]
            (mid_dim, mid_dim),                 # net_sa[2]
            (mid_dim, mid_dim),                 # net_q1[0]
            (mid_dim, 1)]                       # net_q1[2]
    params = {}
    for i, (fan_in, fan_out) in enumerate(dims, start=1):
        key, kw, kb = jax.random.split(key, 3)
        bound = 1.0 / jnp.sqrt(float(fan_in))
        params[f"w{i}"] = jax.random.uniform(
            kw, (fan_in, fan_out), jnp.float32, -bound, bound)
        params[f"b{i}"] = jax.random.uniform(
            kb, (1, fan_out), jnp.float32, -bound, bound)
    return params


def critic_q1_reference(state, action, p):
    x = jnp.concatenate([state, action], axis=1)
    h = jnp.maximum(x @ p["w1"] + p["b1"], 0.0)
    h = jnp.maximum(h @ p["w2"] + p["b2"], 0.0)
    z = h @ p["w3"] + p["b3"]
    h = z * jnp.clip(z + 3.0, 0.0, 6.0) / 6.0
    return h @ p["w4"] + p["b4"]


if __name__ == "__main__":
    batch = 8
    state_dim = 16
    action_dim = 4
    mid_dim = 32

    key = jax.random.PRNGKey(0)
    key, k_s, k_a = jax.random.split(key, 3)
    state = jax.random.normal(k_s, (batch, state_dim), jnp.float32)
    action = jax.random.normal(k_a, (batch, action_dim), jnp.float32)
    params = init_params(key, state_dim, mid_dim, action_dim)

    ref = critic_q1_reference(state, action, params)

    # f32 path (exact).
    q1 = jax.block_until_ready(critic_q1_forward(state, action, params))
    assert q1.shape == (batch, 1)
    assert jnp.allclose(q1, ref, atol=1e-4, rtol=1e-4)

    # bf16 matmul-operand path (MXU lever on v6e/v7x), f32 accumulation.
    q1_bf16 = jax.block_until_ready(
        critic_q1_forward(state, action, params, matmul_dtype=jnp.bfloat16))
    assert q1_bf16.shape == (batch, 1)
    assert bool(jnp.isfinite(q1_bf16).all())
    assert jnp.allclose(q1_bf16, ref, atol=5e-2, rtol=5e-2)

    # Multi-tile path (grid > 1, batch padding) with the same weights.
    key, k_s2, k_a2 = jax.random.split(key, 3)
    state2 = jax.random.normal(k_s2, (200, state_dim), jnp.float32)
    action2 = jax.random.normal(k_a2, (200, action_dim), jnp.float32)
    q1_big = jax.block_until_ready(critic_q1_forward(state2, action2, params))
    ref_big = critic_q1_reference(state2, action2, params)
    assert q1_big.shape == (200, 1)
    assert jnp.allclose(q1_big, ref_big, atol=1e-4, rtol=1e-4)

    # TODO(synk): get_q1_q2 (second critic head, net_q2) is not part of
    # forward(); it can reuse this same kernel with the net_q2 weights.
    print("KERNEL_OK")
</pallas_src>

<mosaic_0001>
module attributes {stable_mosaic.version = 11 : i64} {
  func.func @critic_q1_kernel(%arg0: i32, %arg1: memref<8x16xf32, #tpu.memory_space<vmem>>, %arg2: memref<8x4xf32, #tpu.memory_space<vmem>>, %arg3: memref<16x128xf32, #tpu.memory_space<vmem>>, %arg4: memref<4x128xf32, #tpu.memory_space<vmem>>, %arg5: memref<1x128xf32, #tpu.memory_space<vmem>>, %arg6: memref<128x128xf32, #tpu.memory_space<vmem>>, %arg7: memref<1x128xf32, #tpu.memory_space<vmem>>, %arg8: memref<128x128xf32, #tpu.memory_space<vmem>>, %arg9: memref<1x128xf32, #tpu.memory_space<vmem>>, %arg10: memref<1x128xf32, #tpu.memory_space<vmem>>, %arg11: memref<1x1xf32, #tpu.memory_space<vmem>>, %arg12: memref<8x1xf32, #tpu.memory_space<vmem>>) attributes {dimension_semantics = [#tpu.dimension_semantics<parallel>], iteration_bounds = array<i64: 1>, scalar_prefetch = 0 : i64, scratch_operands = 0 : i64, tpu.core_type = #tpu.core_type<tc>, window_params = [{transform_indices = @transform_0, window_bounds = array<i64: 8, 16>}, {transform_indices = @transform_1, window_bounds = array<i64: 8, 4>}, {pipeline_mode = #tpu.pipeline_mode<synchronous>, transform_indices = @transform_2, window_bounds = array<i64: 16, 128>}, {pipeline_mode = #tpu.pipeline_mode<synchronous>, transform_indices = @transform_3, window_bounds = array<i64: 4, 128>}, {pipeline_mode = #tpu.pipeline_mode<synchronous>, transform_indices = @transform_4, window_bounds = array<i64: 1, 128>}, {pipeline_mode = #tpu.pipeline_mode<synchronous>, transform_indices = @transform_5, window_bounds = array<i64: 128, 128>}, {pipeline_mode = #tpu.pipeline_mode<synchronous>, transform_indices = @transform_6, window_bounds = array<i64: 1, 128>}, {pipeline_mode = #tpu.pipeline_mode<synchronous>, transform_indices = @transform_7, window_bounds = array<i64: 128, 128>}, {pipeline_mode = #tpu.pipeline_mode<synchronous>, transform_indices = @transform_8, window_bounds = array<i64: 1, 128>}, {pipeline_mode = #tpu.pipeline_mode<synchronous>, transform_indices = @transform_9, window_bounds = array<i64: 1, 128>}, {pipeline_mode = #tpu.pipeline_mode<synchronous>, transform_indices = @transform_10, window_bounds = array<i64: 1, 1>}, {transform_indices = @transform_11, window_bounds = array<i64: 8, 1>}]} {
    %c0 = arith.constant 0 : index
    %c0_0 = arith.constant 0 : index
    %0 = vector.load %arg1[%c0, %c0_0] : memref<8x16xf32, #tpu.memory_space<vmem>>, vector<8x16xf32>
    %c0_1 = arith.constant 0 : index
    %c0_2 = arith.constant 0 : index
    %1 = vector.load %arg3[%c0_1, %c0_2] : memref<16x128xf32, #tpu.memory_space<vmem>>, vector<16x128xf32>
    %cst = arith.constant dense<0.000000e+00> : vector<8x128xf32>
    %2 = tpu.matmul %0, %1, %cst {dimension_numbers = #tpu.dot_dimension_numbers<[1], [0], [0], [1], [0, 0, 1, 1], [], []>} : vector<8x16xf32>, vector<16x128xf32>, vector<8x128xf32> -> vector<8x128xf32>
    %c0_3 = arith.constant 0 : index
    %c0_4 = arith.constant 0 : index
    %3 = vector.load %arg2[%c0_3, %c0_4] : memref<8x4xf32, #tpu.memory_space<vmem>>, vector<8x4xf32>
    %c0_5 = arith.constant 0 : index
    %c0_6 = arith.constant 0 : index
    %4 = vector.load %arg4[%c0_5, %c0_6] : memref<4x128xf32, #tpu.memory_space<vmem>>, vector<4x128xf32>
    %cst_7 = arith.constant dense<0.000000e+00> : vector<8x128xf32>
    %5 = tpu.matmul %3, %4, %cst_7 {dimension_numbers = #tpu.dot_dimension_numbers<[1], [0], [0], [1], [0, 0, 1, 1], [], []>} : vector<8x4xf32>, vector<4x128xf32>, vector<8x128xf32> -> vector<8x128xf32>
    %6 = arith.addf %2, %5 : vector<8x128xf32>
    %c0_8 = arith.constant 0 : index
    %c0_9 = arith.constant 0 : index
    %7 = vector.load %arg5[%c0_8, %c0_9] : memref<1x128xf32, #tpu.memory_space<vmem>>, vector<1x128xf32>
    %8 = vector.broadcast %7 : vector<1x128xf32> to vector<8x128xf32>
    %9 = arith.addf %6, %8 : vector<8x128xf32>
    %cst_10 = arith.constant 0.000000e+00 : f32
    %10 = vector.broadcast %cst_10 : f32 to vector<8x128xf32>
    %11 = arith.maximumf %9, %10 : vector<8x128xf32>
    %c0_11 = arith.constant 0 : index
    %c0_12 = arith.constant 0 : index
    %12 = vector.load %arg6[%c0_11, %c0_12] : memref<128x128xf32, #tpu.memory_space<vmem>>, vector<128x128xf32>
    %cst_13 = arith.constant dense<0.000000e+00> : vector<8x128xf32>
    %13 = tpu.matmul %11, %12, %cst_13 {dimension_numbers = #tpu.dot_dimension_numbers<[1], [0], [0], [1], [0, 0, 1, 1], [], []>} : vector<8x128xf32>, vector<128x128xf32>, vector<8x128xf32> -> vector<8x128xf32>
    %c0_14 = arith.constant 0 : index
    %c0_15 = arith.constant 0 : index
    %14 = vector.load %arg7[%c0_14, %c0_15] : memref<1x128xf32, #tpu.memory_space<vmem>>, vector<1x128xf32>
    %15 = vector.broadcast %14 : vector<1x128xf32> to vector<8x128xf32>
    %16 = arith.addf %13, %15 : vector<8x128xf32>
    %cst_16 = arith.constant 0.000000e+00 : f32
    %17 = vector.broadcast %cst_16 : f32 to vector<8x128xf32>
    %18 = arith.maximumf %16, %17 : vector<8x128xf32>
    %c0_17 = arith.constant 0 : index
    %c0_18 = arith.constant 0 : index
    %19 = vector.load %arg8[%c0_17, %c0_18] : memref<128x128xf32, #tpu.memory_space<vmem>>, vector<128x128xf32>
    %cst_19 = arith.constant dense<0.000000e+00> : vector<8x128xf32>
    %20 = tpu.matmul %18, %19, %cst_19 {dimension_numbers = #tpu.dot_dimension_numbers<[1], [0], [0], [1], [0, 0, 1, 1], [], []>} : vector<8x128xf32>, vector<128x128xf32>, vector<8x128xf32> -> vector<8x128xf32>
    %c0_20 = arith.constant 0 : index
    %c0_21 = arith.constant 0 : index
    %21 = vector.load %arg9[%c0_20, %c0_21] : memref<1x128xf32, #tpu.memory_space<vmem>>, vector<1x128xf32>
    %22 = vector.broadcast %21 : vector<1x128xf32> to vector<8x128xf32>
    %23 = arith.addf %20, %22 : vector<8x128xf32>
    %cst_22 = arith.constant 3.000000e+00 : f32
    %24 = vector.broadcast %cst_22 : f32 to vector<8x128xf32>
    %25 = arith.addf %23, %24 : vector<8x128xf32>
    %cst_23 = arith.constant 0.000000e+00 : f32
    %cst_24 = arith.constant 6.000000e+00 : f32
    %26 = vector.broadcast %cst_23 : f32 to vector<8x128xf32>
    %27 = arith.maximumf %26, %25 : vector<8x128xf32>
    %28 = vector.broadcast %cst_24 : f32 to vector<8x128xf32>
    %29 = arith.minimumf %28, %27 : vector<8x128xf32>
    %30 = arith.mulf %23, %29 : vector<8x128xf32>
    %cst_25 = arith.constant 0.166666672 : f32
    %31 = vector.broadcast %cst_25 : f32 to vector<8x128xf32>
    %32 = arith.mulf %30, %31 : vector<8x128xf32>
    %c0_26 = arith.constant 0 : index
    %c0_27 = arith.constant 0 : index
    %33 = vector.load %arg10[%c0_26, %c0_27] : memref<1x128xf32, #tpu.memory_space<vmem>>, vector<1x128xf32>
    %34 = vector.broadcast %33 : vector<1x128xf32> to vector<8x128xf32>
    %35 = arith.mulf %32, %34 : vector<8x128xf32>
    %cst_28 = arith.constant dense<0.000000e+00> : vector<8xf32>
    %36 = vector.multi_reduction <add>, %35, %cst_28 [1] : vector<8x128xf32> to vector<8xf32>
    %37 = vector.shape_cast %36 : vector<8xf32> to vector<8x1xf32>
    %c0_29 = arith.constant 0 : index
    %c0_30 = arith.constant 0 : index
    %38 = vector.load %arg11[%c0_29, %c0_30] : memref<1x1xf32, #tpu.memory_space<vmem>>, vector<1x1xf32>
    %39 = vector.broadcast %38 : vector<1x1xf32> to vector<8x1xf32>
    %40 = arith.addf %37, %39 : vector<8x1xf32>
    %c0_31 = arith.constant 0 : index
    %c0_32 = arith.constant 0 : index
    %41 = vector.load %arg12[%c0_31, %c0_32] : memref<8x1xf32, #tpu.memory_space<vmem>>, vector<8x1xf32>
    tpu.vector_store %arg12[%c0_31, %c0_32], %40 {strides = array<i32>} : memref<8x1xf32, #tpu.memory_space<vmem>>, vector<8x1xf32>,
    return
  }
  func.func @transform_0(%arg0: i32) -> (i32, i32) {
    %c0_i32 = arith.constant 0 : i32
    %c0_i32_0 = arith.constant 0 : i32
    return %arg0, %c0_i32 : i32, i32
  }
  func.func @transform_1(%arg0: i32) -> (i32, i32) {
    %c0_i32 = arith.constant 0 : i32
    %c0_i32_0 = arith.constant 0 : i32
    return %arg0, %c0_i32 : i32, i32
  }
  func.func @transform_2(%arg0: i32) -> (i32, i32) {
    %c0_i32 = arith.constant 0 : i32
    %c0_i32_0 = arith.constant 0 : i32
    %c0_i32_1 = arith.constant 0 : i32
    return %c0_i32, %c0_i32_0 : i32, i32
  }
  func.func @transform_3(%arg0: i32) -> (i32, i32) {
    %c0_i32 = arith.constant 0 : i32
    %c0_i32_0 = arith.constant 0 : i32
    %c0_i32_1 = arith.constant 0 : i32
    return %c0_i32, %c0_i32_0 : i32, i32
  }
  func.func @transform_4(%arg0: i32) -> (i32, i32) {
    %c0_i32 = arith.constant 0 : i32
    %c0_i32_0 = arith.constant 0 : i32
    %c0_i32_1 = arith.constant 0 : i32
    return %c0_i32, %c0_i32_0 : i32, i32
  }
  func.func @transform_5(%arg0: i32) -> (i32, i32) {
    %c0_i32 = arith.constant 0 : i32
    %c0_i32_0 = arith.constant 0 : i32
    %c0_i32_1 = arith.constant 0 : i32
    return %c0_i32, %c0_i32_0 : i32, i32
  }
  func.func @transform_6(%arg0: i32) -> (i32, i32) {
    %c0_i32 = arith.constant 0 : i32
    %c0_i32_0 = arith.constant 0 : i32
    %c0_i32_1 = arith.constant 0 : i32
    return %c0_i32, %c0_i32_0 : i32, i32
  }
  func.func @transform_7(%arg0: i32) -> (i32, i32) {
    %c0_i32 = arith.constant 0 : i32
    %c0_i32_0 = arith.constant 0 : i32
    %c0_i32_1 = arith.constant 0 : i32
    return %c0_i32, %c0_i32_0 : i32, i32
  }
  func.func @transform_8(%arg0: i32) -> (i32, i32) {
    %c0_i32 = arith.constant 0 : i32
    %c0_i32_0 = arith.constant 0 : i32
    %c0_i32_1 = arith.constant 0 : i32
    return %c0_i32, %c0_i32_0 : i32, i32
  }
  func.func @transform_9(%arg0: i32) -> (i32, i32) {
    %c0_i32 = arith.constant 0 : i32
    %c0_i32_0 = arith.constant 0 : i32
    %c0_i32_1 = arith.constant 0 : i32
    return %c0_i32, %c0_i32_0 : i32, i32
  }
  func.func @transform_10(%arg0: i32) -> (i32, i32) {
    %c0_i32 = arith.constant 0 : i32
    %c0_i32_0 = arith.constant 0 : i32
    %c0_i32_1 = arith.constant 0 : i32
    return %c0_i32, %c0_i32_0 : i32, i32
  }
  func.func @transform_11(%arg0: i32) -> (i32, i32) {
    %c0_i32 = arith.constant 0 : i32
    %c0_i32_0 = arith.constant 0 : i32
    return %arg0, %c0_i32 : i32, i32
  }
}

</mosaic_0001>

<llo_original>
// kernel: tpu_custom_call.1
$region0: #{tpu_custom_call.1}
  #allocation0 [shape = 'u32[]', space=smem, size = 0x4, offset = 0x4, fixed_abs, tag = 'smem constant byte address 0x4 - core index']
  #allocation1 [shape = 'u32[72,128]{1,0:T(1,128)}', space=vmem, size = 0x9000, scoped, tag = 'internal scratch']
  #allocation2 [shape = 'f32[1,1]{1,0:T(1,128)S(1)}', space=vmem, size = 0x200, scoped, tag = 'scoped memory for tpu_custom_call.1']
  %s0 = inlined_call_operand.vmem [shape: f32[8,16], index: 0, kind: input, shape index: {}]
  %s1 = inlined_call_operand.vmem [shape: f32[8,4], index: 1, kind: input, shape index: {}]
  %s2 = inlined_call_operand.hbm [shape: f32[16,128], index: 2, kind: input, shape index: {}]
  %s3 = inlined_call_operand.vmem [shape: f32[4,128], index: 3, kind: input, shape index: {}]
  %s4 = inlined_call_operand.vmem [shape: f32[1,128], index: 4, kind: input, shape index: {}]
  %s5 = inlined_call_operand.hbm [shape: f32[128,128], index: 5, kind: input, shape index: {}]
  %s6 = inlined_call_operand.vmem [shape: f32[1,128], index: 6, kind: input, shape index: {}]
  %s7 = inlined_call_operand.hbm [shape: f32[128,128], index: 7, kind: input, shape index: {}]
  %s8 = inlined_call_operand.vmem [shape: f32[1,128], index: 8, kind: input, shape index: {}]
  %s9 = inlined_call_operand.vmem [shape: f32[1,128], index: 9, kind: input, shape index: {}]
  %s10 = inlined_call_operand.<no memory space> [shape: f32[1,1], index: 10, kind: input, shape index: {}]
  %s11 = inlined_call_operand.vmem [shape: f32[8,1], index: 11, kind: output, shape index: {}]
  %s12 = sld [smem:[#allocation0]]
  $region66: #{tpu_custom_call.1} parent=0
    _
  %s14 = ssub.s32 1, %s12
  %s15 = scalar_select 0, %s14, %s12
  %v16 = vstv %s10
  %17 = vst [vmem:[#allocation2] sm:$0x1] %v16
  $region1: #{tpu_custom_call.1} parent=0
    #allocation3 [shape = 'u8[8192]{0}', space=vmem, size = 0x2000, scoped, tag = 'input window, operand 2, single buffered']
    #allocation4 [shape = 's32[1]{0}', space=sflag, size = 0x4, scoped, tag = 'scoped memory for tpu_custom_call.1']
    #allocation5 [shape = 'u8[65536]{0}', space=vmem, size = 0x10000, scoped, tag = 'input window, operand 5, single buffered']
    #allocation6 [shape = 's32[1]{0}', space=sflag, size = 0x4, scoped, tag = 'scoped memory for tpu_custom_call.1']
    #allocation7 [shape = 'u8[65536]{0}', space=vmem, size = 0x10000, scoped, tag = 'input window, operand 7, single buffered']
    %18 = vsyncpa [#allocation4], 0
    %19 = vsyncpa [#allocation6], 0
    // Predicated region
    $region2: #{tpu_custom_call.1} parent=1 // pred_check
      _
    $region3: #{tpu_custom_call.1} parent=1 // pred_check_branch
      %21 = sbr.rel (0) target = $region5
    $region4: #{tpu_custom_call.1} parent=1 // pred_region
      _
    $region5: #{tpu_custom_call.1} parent=1 // pred_fallthru
      _
    // Predicated region
    $region6: #{tpu_custom_call.1} parent=1 // pred_check
      _
    $region7: #{tpu_custom_call.1} parent=1 // pred_check_branch
      %23 = sbr.rel (0) target = $region9
    $region8: #{tpu_custom_call.1} parent=1 // pred_region
      _
    $region9: #{tpu_custom_call.1} parent=1 // pred_fallthru
      _
    // Predicated region
    $region10: #{tpu_custom_call.1} parent=1 // pred_check
      _
    $region11: #{tpu_custom_call.1} parent=1 // pred_check_branch
      %25 = sbr.rel (0) target = $region13
    $region12: #{tpu_custom_call.1} parent=1 // pred_region
      %27 = vsyncadd [#allocation4], 0
      %s28 = sshll.u32 %s2, 4
      %s29 = int_to_ptr.hbm [resolvable:$true] %s28
      %s30 = sshll.u32 [#allocation3], 4
      %s31 = int_to_ptr.vmem [resolvable:$true] %s30
      %36 = dma.hbm_to_vmem [thread:$0]  %s29, 256, %s31, [#allocation4], 128, 128, 8
    $region13: #{tpu_custom_call.1} parent=1 // pred_fallthru
      _
    // Predicated region
    $region14: #{tpu_custom_call.1} parent=1 // pred_check
      _
    $region15: #{tpu_custom_call.1} parent=1 // pred_check_branch
      %38 = sbr.rel (0) target = $region17
    $region16: #{tpu_custom_call.1} parent=1 // pred_region
      _
    $region17: #{tpu_custom_call.1} parent=1 // pred_fallthru
      _
    // Predicated region
    $region18: #{tpu_custom_call.1} parent=1 // pred_check
      _
    $region19: #{tpu_custom_call.1} parent=1 // pred_check_branch
      %40 = sbr.rel (0) target = $region21
    $region20: #{tpu_custom_call.1} parent=1 // pred_region
      _
    $region21: #{tpu_custom_call.1} parent=1 // pred_fallthru
      _
    // Predicated region
    $region22: #{tpu_custom_call.1} parent=1 // pred_check
      _
    $region23: #{tpu_custom_call.1} parent=1 // pred_check_branch
      %42 = sbr.rel (0) target = $region25
    $region24: #{tpu_custom_call.1} parent=1 // pred_region
      %44 = vsyncadd [#allocation6], 0
      %s45 = sshll.u32 %s5, 4
      %s46 = int_to_ptr.hbm [resolvable:$true] %s45
      %s47 = sshll.u32 [#allocation5], 4
      %s48 = int_to_ptr.vmem [resolvable:$true] %s47
      %53 = dma.hbm_to_vmem [thread:$0]  %s46, 2048, %s48, [#allocation6], 128, 128, 8
    $region25: #{tpu_custom_call.1} parent=1 // pred_fallthru
      _
    // Predicated region
    $region26: #{tpu_custom_call.1} parent=1 // pred_check
      _
    $region27: #{tpu_custom_call.1} parent=1 // pred_check_branch
      %55 = sbr.rel (0) target = $region29
    $region28: #{tpu_custom_call.1} parent=1 // pred_region
      _
    $region29: #{tpu_custom_call.1} parent=1 // pred_fallthru
      _
    // Predicated region
    $region30: #{tpu_custom_call.1} parent=1 // pred_check
      _
    $region31: #{tpu_custom_call.1} parent=1 // pred_check_branch
      %57 = sbr.rel (0) target = $region33
    $region32: #{tpu_custom_call.1} parent=1 // pred_region
      %59 = vsyncadd [#allocation6], 0
      %s60 = sshll.u32 %s7, 4
      %s61 = int_to_ptr.hbm [resolvable:$true] %s60
      %s62 = sshll.u32 [#allocation7], 4
      %s63 = int_to_ptr.vmem [resolvable:$true] %s62
      %68 = dma.hbm_to_vmem [thread:$0]  %s61, 2048, %s63, [#allocation6], 128, 128, 8
    $region33: #{tpu_custom_call.1} parent=1 // pred_fallthru
      _
    // Predicated region
    $region34: #{tpu_custom_call.1} parent=1 // pred_check
      _
    $region35: #{tpu_custom_call.1} parent=1 // pred_check_branch
      %70 = sbr.rel (0) target = $region37
    $region36: #{tpu_custom_call.1} parent=1 // pred_region
      _
    $region37: #{tpu_custom_call.1} parent=1 // pred_fallthru
      _
    // Predicated region
    $region38: #{tpu_custom_call.1} parent=1 // pred_check
      _
    $region39: #{tpu_custom_call.1} parent=1 // pred_check_branch
      %72 = sbr.rel (0) target = $region41
    $region40: #{tpu_custom_call.1} parent=1 // pred_region
      _
    $region41: #{tpu_custom_call.1} parent=1 // pred_fallthru
      _
    // Predicated region
    $region42: #{tpu_custom_call.1} parent=1 // pred_check
      _
    $region43: #{tpu_custom_call.1} parent=1 // pred_check_branch
      %74 = sbr.rel (0) target = $region45
    $region44: #{tpu_custom_call.1} parent=1 // pred_region
      _
    $region45: #{tpu_custom_call.1} parent=1 // pred_fallthru
      _
    // Predicated region
    $region46: #{tpu_custom_call.1} parent=1 // pred_check
      _
    $region47: #{tpu_custom_call.1} parent=1 // pred_check_branch
      %76 = sbr.rel (0) target = $region49
    $region48: #{tpu_custom_call.1} parent=1 // pred_region
      %78 = dma.done [#allocation4], 256
    $region49: #{tpu_custom_call.1} parent=1 // pred_fallthru
      _
    // Predicated region
    $region50: #{tpu_custom_call.1} parent=1 // pred_check
      _
    $region51: #{tpu_custom_call.1} parent=1 // pred_check_branch
      %80 = sbr.rel (0) target = $region53
    $region52: #{tpu_custom_call.1} parent=1 // pred_region
      %82 = dma.done [#allocation6], 2048
    $region53: #{tpu_custom_call.1} parent=1 // pred_fallthru
      _
    // Predicated region
    $region54: #{tpu_custom_call.1} parent=1 // pred_check
      _
    $region55: #{tpu_custom_call.1} parent=1 // pred_check_branch
      %84 = sbr.rel (0) target = $region57
    $region56: #{tpu_custom_call.1} parent=1 // pred_region
      %86 = dma.done [#allocation6], 2048
    $region57: #{tpu_custom_call.1} parent=1 // pred_fallthru
      _
    %v87 = vld [vmem:[%s0] sm:$0xff]
    %v88 = vld [vmem:[#allocation3] sm:$0xff]
    %v89 = vld [vmem:[#allocation3 + $0x8] sm:$0xff]
    %v90 = vld [vmem:[%s1] sm:$0xff]
    %v91 = vld [vmem:[%s3] sm:$0xf]
    %vm92 = vcmask 31744
    %v94 = vsel %vm92, %v90, 0
    %vm96 = vcmask 1043456
    %v98 = vsel %vm96, %v91, 0
    %100 = vmatpush.msra.mxu0 0.0
    %101 = vmatpush.msra.mxu0 0.0
    %102 = vmatpush.msra.mxu0 0.0
    %103 = vmatpush.msra.mxu0 0.0
    %104 = vmatpush.msra.mxu0 0.0
    %105 = vmatpush.msra.mxu0 0.0
    %106 = vmatpush.msra.mxu0 0.0
    %107 = vmatpush.msra.mxu0 0.0
    %108 = vmatpush.msra.mxu0 0.0
    %109 = vmatpush.msra.mxu0 0.0
    %110 = vmatpush.msra.mxu0 0.0
    %111 = vmatpush.msra.mxu0 0.0
    %112 = vmatpush.msra.mxu0 0.0
    %113 = vmatpush.msra.mxu0 0.0
    %114 = vmatpush.msra.mxu0 0.0
    %115 = vmatpush.msra.mxu0 %v98
    %116 = vmatmul.f32.gmra.mxu0 %v94
    %v117 = vpop.f32.mrf.mxu0
    %v118 = vadd.f32 0.0, %v117
    %119 = vdwg.mxu0
    %vm120 = vcmask 130048
    %v122 = vsel %vm120, %v87, 0
    %124 = vmatpush.msra.mxu0 0.0
    %125 = vmatpush.msra.mxu0 0.0
    %126 = vmatpush.msra.mxu0 0.0
    %127 = vmatpush.msra.mxu0 0.0
    %128 = vmatpush.msra.mxu0 0.0
    %129 = vmatpush.msra.mxu0 0.0
    %130 = vmatpush.msra.mxu0 0.0
    %131 = vmatpush.msra.mxu0 0.0
    %132 = vmatpush.msra.mxu0 0.0
    %133 = vmatpush.msra.mxu0 0.0
    %134 = vmatpush.msra.mxu0 0.0
    %135 = vmatpush.msra.mxu0 0.0
    %136 = vmatpush.msra.mxu0 0.0
    %137 = vmatpush.msra.mxu0 0.0
    %138 = vmatpush.msra.mxu0 %v89
    %139 = vmatpush.msra.mxu0 %v88
    %140 = vmatmul.f32.gmra.mxu0 %v122
    %v141 = vpop.f32.mrf.mxu0
    %v142 = vadd.f32 %v118, %v141
    %143 = vdwg.mxu0
    %v144 = vld [vmem:[%s4] sm:$0x1]
    %v146 = vperm.slane %v144, 0
    %v148 = vadd.f32 %v142, %v146
    %v149 = vmax.f32 %v148, 0.0
    %v150 = vld [vmem:[#allocation5] sm:$0xff]
    %v151 = vld [vmem:[#allocation5 + $0x8] sm:$0xff]
    %v152 = vld [vmem:[#allocation5 + $0x10] sm:$0xff]
    %v153 = vld [vmem:[#allocation5 + $0x18] sm:$0xff]
    %v154 = vld [vmem:[#allocation5 + $0x20] sm:$0xff]
    %v155 = vld [vmem:[#allocation5 + $0x28] sm:$0xff]
    %v156 = vld [vmem:[#allocation5 + $0x30] sm:$0xff]
    %v157 = vld [vmem:[#allocation5 + $0x38] sm:$0xff]
    %v158 = vld [vmem:[#allocation5 + $0x40] sm:$0xff]
    %v159 = vld [vmem:[#allocation5 + $0x48] sm:$0xff]
    %v160 = vld [vmem:[#allocation5 + $0x50] sm:$0xff]
    %v161 = vld [vmem:[#allocation5 + $0x58] sm:$0xff]
    %v162 = vld [vmem:[#allocation5 + $0x60] sm:$0xff]
    %v163 = vld [vmem:[#allocation5 + $0x68] sm:$0xff]
    %v164 = vld [vmem:[#allocation5 + $0x70] sm:$0xff]
    %v165 = vld [vmem:[#allocation5 + $0x78] sm:$0xff]
    %v166 = vld [vmem:[%s6] sm:$0x1]
    %v168 = vperm.slane %v166, 0
    %170 = vmatpush.msra.mxu0 %v165
    %171 = vmatpush.msra.mxu0 %v164
    %172 = vmatpush.msra.mxu0 %v163
    %173 = vmatpush.msra.mxu0 %v162
    %174 = vmatpush.msra.mxu0 %v161
    %175 = vmatpush.msra.mxu0 %v160
    %176 = vmatpush.msra.mxu0 %v159
    %177 = vmatpush.msra.mxu0 %v158
    %178 = vmatpush.msra.mxu0 %v157
    %179 = vmatpush.msra.mxu0 %v156
    %180 = vmatpush.msra.mxu0 %v155
    %181 = vmatpush.msra.mxu0 %v154
    %182 = vmatpush.msra.mxu0 %v153
    %183 = vmatpush.msra.mxu0 %v152
    %184 = vmatpush.msra.mxu0 %v151
    %185 = vmatpush.msra.mxu0 %v150
    %186 = vmatmul.f32.gmra.mxu0 %v149
    %v187 = vpop.f32.mrf.mxu0
    %v188 = vadd.f32 %v168, %v187
    %189 = vdwg.mxu0
    %v190 = vmax.f32 %v188, 0.0
    %v191 = vld [vmem:[#allocation7] sm:$0xff]
    %v192 = vld [vmem:[#allocation7 + $0x8] sm:$0xff]
    %v193 = vld [vmem:[#allocation7 + $0x10] sm:$0xff]
    %v194 = vld [vmem:[#allocation7 + $0x18] sm:$0xff]
    %v195 = vld [vmem:[#allocation7 + $0x20] sm:$0xff]
    %v196 = vld [vmem:[#allocation7 + $0x28] sm:$0xff]
    %v197 = vld [vmem:[#allocation7 + $0x30] sm:$0xff]
    %v198 = vld [vmem:[#allocation7 + $0x38] sm:$0xff]
    %v199 = vld [vmem:[#allocation7 + $0x40] sm:$0xff]
    %v200 = vld [vmem:[#allocation7 + $0x48] sm:$0xff]
    %v201 = vld [vmem:[#allocation7 + $0x50] sm:$0xff]
    %v202 = vld [vmem:[#allocation7 + $0x58] sm:$0xff]
    %v203 = vld [vmem:[#allocation7 + $0x60] sm:$0xff]
    %v204 = vld [vmem:[#allocation7 + $0x68] sm:$0xff]
    %v205 = vld [vmem:[#allocation7 + $0x70] sm:$0xff]
    %v206 = vld [vmem:[#allocation7 + $0x78] sm:$0xff]
    %v207 = vld [vmem:[%s8] sm:$0x1]
    %v209 = vperm.slane %v207, 0
    %211 = vmatpush.msra.mxu0 %v206
    %212 = vmatpush.msra.mxu0 %v205
    %213 = vmatpush.msra.mxu0 %v204
    %214 = vmatpush.msra.mxu0 %v203
    %215 = vmatpush.msra.mxu0 %v202
    %216 = vmatpush.msra.mxu0 %v201
    %217 = vmatpush.msra.mxu0 %v200
    %218 = vmatpush.msra.mxu0 %v199
    %219 = vmatpush.msra.mxu0 %v198
    %220 = vmatpush.msra.mxu0 %v197
    %221 = vmatpush.msra.mxu0 %v196
    %222 = vmatpush.msra.mxu0 %v195
    %223 = vmatpush.msra.mxu0 %v194
    %224 = vmatpush.msra.mxu0 %v193
    %225 = vmatpush.msra.mxu0 %v192
    %226 = vmatpush.msra.mxu0 %v191
    %227 = vmatmul.f32.gmra.mxu0 %v190
    %v228 = vpop.f32.mrf.mxu0
    %v229 = vadd.f32 %v209, %v228
    %230 = vdwg.mxu0
    %v231 = vadd.f32 %v229, 3.0
    %v232 = vmax.f32 %v231, 0.0
    %v233 = vmin.f32 %v232, 6.0
    %v234 = vmul.f32 %v229, %v233
    %v235 = vmul.f32 %v234, 0.16666667
    %v236 = vld [vmem:[%s9] sm:$0x1]
    %v238 = vperm.slane %v236, 0
    %v240 = vmul.f32 %v235, %v238
    %241 = vadd.xlane.f32.xlu0 %v240
    %v242 = vpop.xlane.xlu0 %241
    %v243 = vld [vmem:[#allocation2] sm:$0x1]
    %v245 = vperm.slane %v243, 0
    %v247 = vadd.f32 %v242, %v245
    %vm248 = vcmask 7168
    %249 = vst.msk [vmem:[%s11] sm:$0xff] %vm248, %v247
    // Predicated region
    $region58: #{tpu_custom_call.1} parent=1 // pred_check
      _
    $region59: #{tpu_custom_call.1} parent=1 // pred_check_branch
      %251 = sbr.rel (0) target = $region61
    $region60: #{tpu_custom_call.1} parent=1 // pred_region
      _
    $region61: #{tpu_custom_call.1} parent=1 // pred_fallthru
      _
    // Predicated region
    $region62: #{tpu_custom_call.1} parent=1 // pred_check
      _
    $region63: #{tpu_custom_call.1} parent=1 // pred_check_branch
      %253 = sbr.rel (0) target = $region65
    $region64: #{tpu_custom_call.1} parent=1 // pred_region
      _
    $region65: #{tpu_custom_call.1} parent=1 // pred_fallthru
      _
    %254 = vsyncpa [#allocation4], 1
    %255 = vsyncpa [#allocation6], 1

</llo_original>
